<compile_context>
chip_gen: v5e
topology: v5e:2x2
jax: 0.10.0
libtpu: 0.0.40
codegen_flags: <defaults>
</compile_context>

<pallas_src>
import math
from functools import partial

import jax
import jax.numpy as jnp
from jax.experimental import pallas as pl
from jax.experimental.pallas import tpu as pltpu

HIDDEN = 256
LANE = 128


def _round_up(x, m):
    return ((x + m - 1) // m) * m


def q_network_kernel(x_ref, w1_ref, b1_ref, w2_ref, b2_ref, wq_ref, bq_ref, q_ref):
    """One batch tile of: ReLU(ReLU(x@W1+b1)@W2+b2)@Wq+bq  (Wq zero-padded to 128 lanes)."""
    wdt = w1_ref.dtype                       # bf16 MXU inputs, f32 accumulate
    x = x_ref[...].astype(wdt)

    h1 = jnp.dot(x, w1_ref[...], preferred_element_type=jnp.float32)
    h1 = jnp.maximum(h1 + b1_ref[...], 0.0)

    h2 = jnp.dot(h1.astype(wdt), w2_ref[...], preferred_element_type=jnp.float32)
    h2 = jnp.maximum(h2 + b2_ref[...], 0.0)

    q = jnp.dot(h2.astype(wdt), wq_ref[...], preferred_element_type=jnp.float32)
    q_ref[...] = q + bq_ref[...]             # lane-dense (TB, 128) store


@partial(jax.jit, static_argnames=("batch_tile",))
def continuous_q_forward(obs, action, packed, *, batch_tile=128):
    """Q(obs, action) -> (B, 1), matching the PyTorch module's forward."""
    B = obs.shape[0]
    w1p, b1 = packed["w1"], packed["b1"]
    w2, b2 = packed["w2"], packed["b2"]
    wqp, bqp = packed["wq"], packed["bq"]
    KP = w1p.shape[0]

    x = jnp.concatenate([obs, action], axis=-1)
    K = x.shape[1]

    # Pad features to lane-aligned KP (zero W1 rows keep the result exact) and
    # batch to a multiple of the batch tile; cast to bf16 so the kernel DMAs
    # half the bytes (pad + cast fuse with the concat under jit).
    TB = min(batch_tile, _round_up(B, 8))
    PB = _round_up(B, TB)
    x = jnp.pad(x, ((0, PB - B), (0, KP - K))).astype(w1p.dtype)

    const = lambda i: (0, 0)                 # weights stay VMEM-resident across the grid
    q_pad = pl.pallas_call(
        q_network_kernel,
        out_shape=jax.ShapeDtypeStruct((PB, LANE), jnp.float32),
        grid=(PB // TB,),
        in_specs=[
            pl.BlockSpec((TB, KP), lambda i: (i, 0)),       # x tile (bf16)
            pl.BlockSpec((KP, HIDDEN), const),              # W1 (zero-padded rows)
            pl.BlockSpec((1, HIDDEN), const),               # b1 (f32)
            pl.BlockSpec((HIDDEN, HIDDEN), const),          # W2
            pl.BlockSpec((1, HIDDEN), const),               # b2 (f32)
            pl.BlockSpec((HIDDEN, LANE), const),            # Wq (zero-padded to 128 cols)
            pl.BlockSpec((1, LANE), const),                 # bq (zero-padded, f32)
        ],
        out_specs=pl.BlockSpec((TB, LANE), lambda i: (i, 0)),
        compiler_params=pltpu.CompilerParams(
            dimension_semantics=("parallel",)),             # megacore on v7x
    )(x, w1p, b1, w2, b2, wqp, bqp)

    return q_pad[:B, :1]


def init_params(key, obs_dim, action_dim):
    """PyTorch-style uniform(+/- 1/sqrt(fan_in)) init, (in, out) weight layout."""
    def linear(k, fan_in, fan_out):
        kw, kb = jax.random.split(k)
        bound = 1.0 / math.sqrt(fan_in)
        w = jax.random.uniform(kw, (fan_in, fan_out), jnp.float32, -bound, bound)
        b = jax.random.uniform(kb, (1, fan_out), jnp.float32, -bound, bound)
        return w, b

    k1, k2, k3 = jax.random.split(key, 3)
    K = obs_dim + action_dim
    w1, b1 = linear(k1, K, HIDDEN)
    w2, b2 = linear(k2, HIDDEN, HIDDEN)
    wq, bq = linear(k3, HIDDEN, 1)
    return dict(w1=w1, b1=b1, w2=w2, b2=b2, wq=wq, bq=bq)


def pack_params(params, obs_dim, action_dim, weight_dtype=jnp.bfloat16):
    """Zero-pad W1 rows to a lane multiple, Wq/bq columns to 128; cast weights to bf16."""
    K = obs_dim + action_dim
    KP = max(LANE, _round_up(K, LANE))
    w1p = jnp.zeros((KP, HIDDEN), weight_dtype).at[:K].set(
        params["w1"].astype(weight_dtype))
    wqp = jnp.zeros((HIDDEN, LANE), weight_dtype).at[:, :1].set(
        params["wq"].astype(weight_dtype))
    bqp = jnp.zeros((1, LANE), jnp.float32).at[:, :1].set(params["bq"])
    return dict(
        w1=w1p, b1=params["b1"].astype(jnp.float32),
        w2=params["w2"].astype(weight_dtype), b2=params["b2"].astype(jnp.float32),
        wq=wqp, bq=bqp,
    )


def reference_forward(obs, action, params):
    x = jnp.concatenate([obs, action], axis=-1)
    h1 = jnp.maximum(x @ params["w1"] + params["b1"], 0.0)
    h2 = jnp.maximum(h1 @ params["w2"] + params["b2"], 0.0)
    return h2 @ params["wq"] + params["bq"]


if __name__ == "__main__":
    B, OBS_DIM, ACTION_DIM = 8, 32, 8

    root = jax.random.PRNGKey(0)
    k_params, k_obs, k_act = jax.random.split(root, 3)

    params = init_params(k_params, OBS_DIM, ACTION_DIM)
    packed = pack_params(params, OBS_DIM, ACTION_DIM)
    obs = jax.random.normal(k_obs, (B, OBS_DIM), jnp.float32)
    action = jax.random.normal(k_act, (B, ACTION_DIM), jnp.float32)

    q = continuous_q_forward(obs, action, packed)
    jax.block_until_ready(q)

    q_ref = reference_forward(obs, action, params)   # f32 reference
    assert q.shape == (B, 1)
    assert bool(jnp.all(jnp.isfinite(q)))
    assert bool(jnp.allclose(q, q_ref, atol=5e-2, rtol=5e-2))  # bf16 MXU tolerance
    print("KERNEL_OK")
</pallas_src>

<mosaic_0001>
module attributes {stable_mosaic.version = 11 : i64} {
  func.func @q_network_kernel(%arg0: i32, %arg1: memref<8x128xbf16, #tpu.memory_space<vmem>>, %arg2: memref<128x256xbf16, #tpu.memory_space<vmem>>, %arg3: memref<1x256xf32, #tpu.memory_space<vmem>>, %arg4: memref<256x256xbf16, #tpu.memory_space<vmem>>, %arg5: memref<1x256xf32, #tpu.memory_space<vmem>>, %arg6: memref<256x128xbf16, #tpu.memory_space<vmem>>, %arg7: memref<1x128xf32, #tpu.memory_space<vmem>>, %arg8: memref<8x128xf32, #tpu.memory_space<vmem>>) attributes {dimension_semantics = [#tpu.dimension_semantics<parallel>], iteration_bounds = array<i64: 1>, scalar_prefetch = 0 : i64, scratch_operands = 0 : i64, tpu.core_type = #tpu.core_type<tc>, window_params = [{transform_indices = @transform_0, window_bounds = array<i64: 8, 128>}, {pipeline_mode = #tpu.pipeline_mode<synchronous>, transform_indices = @transform_1, window_bounds = array<i64: 128, 256>}, {pipeline_mode = #tpu.pipeline_mode<synchronous>, transform_indices = @transform_2, window_bounds = array<i64: 1, 256>}, {pipeline_mode = #tpu.pipeline_mode<synchronous>, transform_indices = @transform_3, window_bounds = array<i64: 256, 256>}, {pipeline_mode = #tpu.pipeline_mode<synchronous>, transform_indices = @transform_4, window_bounds = array<i64: 1, 256>}, {pipeline_mode = #tpu.pipeline_mode<synchronous>, transform_indices = @transform_5, window_bounds = array<i64: 256, 128>}, {pipeline_mode = #tpu.pipeline_mode<synchronous>, transform_indices = @transform_6, window_bounds = array<i64: 1, 128>}, {transform_indices = @transform_7, window_bounds = array<i64: 8, 128>}]} {
    %c0 = arith.constant 0 : index
    %c0_0 = arith.constant 0 : index
    %0 = vector.load %arg1[%c0, %c0_0] : memref<8x128xbf16, #tpu.memory_space<vmem>>, vector<8x128xbf16>
    %c0_1 = arith.constant 0 : index
    %c0_2 = arith.constant 0 : index
    %1 = vector.load %arg2[%c0_1, %c0_2] : memref<128x256xbf16, #tpu.memory_space<vmem>>, vector<128x256xbf16>
    %cst = arith.constant dense<0.000000e+00> : vector<8x256xf32>
    %2 = tpu.matmul %0, %1, %cst {dimension_numbers = #tpu.dot_dimension_numbers<[1], [0], [0], [1], [0, 0, 1, 1], [], []>} : vector<8x128xbf16>, vector<128x256xbf16>, vector<8x256xf32> -> vector<8x256xf32>
    %c0_3 = arith.constant 0 : index
    %c0_4 = arith.constant 0 : index
    %3 = vector.load %arg3[%c0_3, %c0_4] : memref<1x256xf32, #tpu.memory_space<vmem>>, vector<1x256xf32>
    %4 = vector.broadcast %3 : vector<1x256xf32> to vector<8x256xf32>
    %5 = arith.addf %2, %4 : vector<8x256xf32>
    %cst_5 = arith.constant 0.000000e+00 : f32
    %6 = vector.broadcast %cst_5 : f32 to vector<8x256xf32>
    %7 = arith.maximumf %5, %6 : vector<8x256xf32>
    %8 = arith.truncf %7 : vector<8x256xf32> to vector<8x256xbf16>
    %c0_6 = arith.constant 0 : index
    %c0_7 = arith.constant 0 : index
    %9 = vector.load %arg4[%c0_6, %c0_7] : memref<256x256xbf16, #tpu.memory_space<vmem>>, vector<256x256xbf16>
    %cst_8 = arith.constant dense<0.000000e+00> : vector<8x256xf32>
    %10 = tpu.matmul %8, %9, %cst_8 {dimension_numbers = #tpu.dot_dimension_numbers<[1], [0], [0], [1], [0, 0, 1, 1], [], []>} : vector<8x256xbf16>, vector<256x256xbf16>, vector<8x256xf32> -> vector<8x256xf32>
    %c0_9 = arith.constant 0 : index
    %c0_10 = arith.constant 0 : index
    %11 = vector.load %arg5[%c0_9, %c0_10] : memref<1x256xf32, #tpu.memory_space<vmem>>, vector<1x256xf32>
    %12 = vector.broadcast %11 : vector<1x256xf32> to vector<8x256xf32>
    %13 = arith.addf %10, %12 : vector<8x256xf32>
    %cst_11 = arith.constant 0.000000e+00 : f32
    %14 = vector.broadcast %cst_11 : f32 to vector<8x256xf32>
    %15 = arith.maximumf %13, %14 : vector<8x256xf32>
    %16 = arith.truncf %15 : vector<8x256xf32> to vector<8x256xbf16>
    %c0_12 = arith.constant 0 : index
    %c0_13 = arith.constant 0 : index
    %17 = vector.load %arg6[%c0_12, %c0_13] : memref<256x128xbf16, #tpu.memory_space<vmem>>, vector<256x128xbf16>
    %cst_14 = arith.constant dense<0.000000e+00> : vector<8x128xf32>
    %18 = tpu.matmul %16, %17, %cst_14 {dimension_numbers = #tpu.dot_dimension_numbers<[1], [0], [0], [1], [0, 0, 1, 1], [], []>} : vector<8x256xbf16>, vector<256x128xbf16>, vector<8x128xf32> -> vector<8x128xf32>
    %c0_15 = arith.constant 0 : index
    %c0_16 = arith.constant 0 : index
    %19 = vector.load %arg7[%c0_15, %c0_16] : memref<1x128xf32, #tpu.memory_space<vmem>>, vector<1x128xf32>
    %20 = vector.broadcast %19 : vector<1x128xf32> to vector<8x128xf32>
    %21 = arith.addf %18, %20 : vector<8x128xf32>
    %c0_17 = arith.constant 0 : index
    %c0_18 = arith.constant 0 : index
    %22 = vector.load %arg8[%c0_17, %c0_18] : memref<8x128xf32, #tpu.memory_space<vmem>>, vector<8x128xf32>
    tpu.vector_store %arg8[%c0_17, %c0_18], %21 {strides = array<i32>} : memref<8x128xf32, #tpu.memory_space<vmem>>, vector<8x128xf32>,
    return
  }
  func.func @transform_0(%arg0: i32) -> (i32, i32) {
    %c0_i32 = arith.constant 0 : i32
    %c0_i32_0 = arith.constant 0 : i32
    return %arg0, %c0_i32 : i32, i32
  }
  func.func @transform_1(%arg0: i32) -> (i32, i32) {
    %c0_i32 = arith.constant 0 : i32
    %c0_i32_0 = arith.constant 0 : i32
    %c0_i32_1 = arith.constant 0 : i32
    return %c0_i32, %c0_i32_0 : i32, i32
  }
  func.func @transform_2(%arg0: i32) -> (i32, i32) {
    %c0_i32 = arith.constant 0 : i32
    %c0_i32_0 = arith.constant 0 : i32
    %c0_i32_1 = arith.constant 0 : i32
    return %c0_i32, %c0_i32_0 : i32, i32
  }
  func.func @transform_3(%arg0: i32) -> (i32, i32) {
    %c0_i32 = arith.constant 0 : i32
    %c0_i32_0 = arith.constant 0 : i32
    %c0_i32_1 = arith.constant 0 : i32
    return %c0_i32, %c0_i32_0 : i32, i32
  }
  func.func @transform_4(%arg0: i32) -> (i32, i32) {
    %c0_i32 = arith.constant 0 : i32
    %c0_i32_0 = arith.constant 0 : i32
    %c0_i32_1 = arith.constant 0 : i32
    return %c0_i32, %c0_i32_0 : i32, i32
  }
  func.func @transform_5(%arg0: i32) -> (i32, i32) {
    %c0_i32 = arith.constant 0 : i32
    %c0_i32_0 = arith.constant 0 : i32
    %c0_i32_1 = arith.constant 0 : i32
    return %c0_i32, %c0_i32_0 : i32, i32
  }
  func.func @transform_6(%arg0: i32) -> (i32, i32) {
    %c0_i32 = arith.constant 0 : i32
    %c0_i32_0 = arith.constant 0 : i32
    %c0_i32_1 = arith.constant 0 : i32
    return %c0_i32, %c0_i32_0 : i32, i32
  }
  func.func @transform_7(%arg0: i32) -> (i32, i32) {
    %c0_i32 = arith.constant 0 : i32
    %c0_i32_0 = arith.constant 0 : i32
    return %arg0, %c0_i32 : i32, i32
  }
}

</mosaic_0001>

<llo_original>
// kernel: continuous_q_forward.1
$region0: #{continuous_q_forward.1}
  #allocation0 [shape = 'u32[]', space=smem, size = 0x4, offset = 0x4, fixed_abs, tag = 'smem constant byte address 0x4 - core index']
  #allocation1 [shape = 'u32[72,128]{1,0:T(1,128)}', space=vmem, size = 0x9000, scoped, tag = 'internal scratch']
  %s0 = inlined_call_operand.vmem [shape: bf16[8,128], index: 0, kind: input, shape index: {}]
  %s1 = inlined_call_operand.hbm [shape: bf16[128,256], index: 1, kind: input, shape index: {}]
  %s2 = inlined_call_operand.vmem [shape: f32[1,256], index: 2, kind: input, shape index: {}]
  %s3 = inlined_call_operand.hbm [shape: bf16[256,256], index: 3, kind: input, shape index: {}]
  %s4 = inlined_call_operand.vmem [shape: f32[1,256], index: 4, kind: input, shape index: {}]
  %s5 = inlined_call_operand.hbm [shape: bf16[256,128], index: 5, kind: input, shape index: {}]
  %s6 = inlined_call_operand.vmem [shape: f32[1,128], index: 6, kind: input, shape index: {}]
  %s7 = inlined_call_operand.vmem [shape: f32[8,128], index: 7, kind: output, shape index: {}]
  %s8 = sld [smem:[#allocation0]]
  $region50: #{continuous_q_forward.1} parent=0
    _
  %s10 = ssub.s32 1, %s8
  %s11 = scalar_select 0, %s10, %s8
  $region1: #{continuous_q_forward.1} parent=0
    #allocation2 [shape = 'u8[65536]{0}', space=vmem, size = 0x10000, scoped, tag = 'input window, operand 1, single buffered']
    #allocation3 [shape = 's32[1]{0}', space=sflag, size = 0x4, scoped, tag = 'scoped memory for continuous_q_forward.1']
    #allocation4 [shape = 'u8[131072]{0}', space=vmem, size = 0x20000, scoped, tag = 'input window, operand 3, single buffered']
    #allocation5 [shape = 's32[1]{0}', space=sflag, size = 0x4, scoped, tag = 'scoped memory for continuous_q_forward.1']
    #allocation6 [shape = 'u8[65536]{0}', space=vmem, size = 0x10000, scoped, tag = 'input window, operand 5, single buffered']
    %12 = vsyncpa [#allocation3], 0
    %13 = vsyncpa [#allocation5], 0
    // Predicated region
    $region2: #{continuous_q_forward.1} parent=1 // pred_check
      _
    $region3: #{continuous_q_forward.1} parent=1 // pred_check_branch
      %15 = sbr.rel (0) target = $region5
    $region4: #{continuous_q_forward.1} parent=1 // pred_region
      _
    $region5: #{continuous_q_forward.1} parent=1 // pred_fallthru
      _
    // Predicated region
    $region6: #{continuous_q_forward.1} parent=1 // pred_check
      _
    $region7: #{continuous_q_forward.1} parent=1 // pred_check_branch
      %17 = sbr.rel (0) target = $region9
    $region8: #{continuous_q_forward.1} parent=1 // pred_region
      %19 = vsyncadd [#allocation3], 0
      %s20 = sshll.u32 %s1, 4
      %s21 = int_to_ptr.hbm [resolvable:$true] %s20
      %s22 = sshll.u32 [#allocation2], 4
      %s23 = int_to_ptr.vmem [resolvable:$true] %s22
      %28 = dma.hbm_to_vmem [thread:$0]  %s21, 2048, %s23, [#allocation3], 128, 128, 8
    $region9: #{continuous_q_forward.1} parent=1 // pred_fallthru
      _
    // Predicated region
    $region10: #{continuous_q_forward.1} parent=1 // pred_check
      _
    $region11: #{continuous_q_forward.1} parent=1 // pred_check_branch
      %30 = sbr.rel (0) target = $region13
    $region12: #{continuous_q_forward.1} parent=1 // pred_region
      _
    $region13: #{continuous_q_forward.1} parent=1 // pred_fallthru
      _
    // Predicated region
    $region14: #{continuous_q_forward.1} parent=1 // pred_check
      _
    $region15: #{continuous_q_forward.1} parent=1 // pred_check_branch
      %32 = sbr.rel (0) target = $region17
    $region16: #{continuous_q_forward.1} parent=1 // pred_region
      %34 = vsyncadd [#allocation5], 0
      %s35 = sshll.u32 %s3, 4
      %s36 = int_to_ptr.hbm [resolvable:$true] %s35
      %s37 = sshll.u32 [#allocation4], 4
      %s38 = int_to_ptr.vmem [resolvable:$true] %s37
      %43 = dma.hbm_to_vmem [thread:$0]  %s36, 4096, %s38, [#allocation5], 128, 128, 8
    $region17: #{continuous_q_forward.1} parent=1 // pred_fallthru
      _
    // Predicated region
    $region18: #{continuous_q_forward.1} parent=1 // pred_check
      _
    $region19: #{continuous_q_forward.1} parent=1 // pred_check_branch
      %45 = sbr.rel (0) target = $region21
    $region20: #{continuous_q_forward.1} parent=1 // pred_region
      _
    $region21: #{continuous_q_forward.1} parent=1 // pred_fallthru
      _
    // Predicated region
    $region22: #{continuous_q_forward.1} parent=1 // pred_check
      _
    $region23: #{continuous_q_forward.1} parent=1 // pred_check_branch
      %47 = sbr.rel (0) target = $region25
    $region24: #{continuous_q_forward.1} parent=1 // pred_region
      %49 = vsyncadd [#allocation5], 0
      %s50 = sshll.u32 %s5, 4
      %s51 = int_to_ptr.hbm [resolvable:$true] %s50
      %s52 = sshll.u32 [#allocation6], 4
      %s53 = int_to_ptr.vmem [resolvable:$true] %s52
      %58 = dma.hbm_to_vmem [thread:$0]  %s51, 2048, %s53, [#allocation5], 64, 64, 4
    $region25: #{continuous_q_forward.1} parent=1 // pred_fallthru
      _
    // Predicated region
    $region26: #{continuous_q_forward.1} parent=1 // pred_check
      _
    $region27: #{continuous_q_forward.1} parent=1 // pred_check_branch
      %60 = sbr.rel (0) target = $region29
    $region28: #{continuous_q_forward.1} parent=1 // pred_region
      _
    $region29: #{continuous_q_forward.1} parent=1 // pred_fallthru
      _
    // Predicated region
    $region30: #{continuous_q_forward.1} parent=1 // pred_check
      _
    $region31: #{continuous_q_forward.1} parent=1 // pred_check_branch
      %62 = sbr.rel (0) target = $region33
    $region32: #{continuous_q_forward.1} parent=1 // pred_region
      %64 = dma.done [#allocation3], 2048
    $region33: #{continuous_q_forward.1} parent=1 // pred_fallthru
      _
    // Predicated region
    $region34: #{continuous_q_forward.1} parent=1 // pred_check
      _
    $region35: #{continuous_q_forward.1} parent=1 // pred_check_branch
      %66 = sbr.rel (0) target = $region37
    $region36: #{continuous_q_forward.1} parent=1 // pred_region
      %68 = dma.done [#allocation5], 4096
    $region37: #{continuous_q_forward.1} parent=1 // pred_fallthru
      _
    // Predicated region
    $region38: #{continuous_q_forward.1} parent=1 // pred_check
      _
    $region39: #{continuous_q_forward.1} parent=1 // pred_check_branch
      %70 = sbr.rel (0) target = $region41
    $region40: #{continuous_q_forward.1} parent=1 // pred_region
      %72 = dma.done [#allocation5], 2048
    $region41: #{continuous_q_forward.1} parent=1 // pred_fallthru
      _
    %v73 = vld [vmem:[%s0] sm:$0xf]
    %v74 = vld [vmem:[#allocation2] sm:$0xff]
    %v75 = vld [vmem:[#allocation2 + $0x8] sm:$0xff]
    %v76 = vld [vmem:[#allocation2 + $0x10] sm:$0xff]
    %v77 = vld [vmem:[#allocation2 + $0x18] sm:$0xff]
    %v78 = vld [vmem:[#allocation2 + $0x20] sm:$0xff]
    %v79 = vld [vmem:[#allocation2 + $0x28] sm:$0xff]
    %v80 = vld [vmem:[#allocation2 + $0x30] sm:$0xff]
    %v81 = vld [vmem:[#allocation2 + $0x38] sm:$0xff]
    %v82 = vld [vmem:[#allocation2 + $0x40] sm:$0xff]
    %v83 = vld [vmem:[#allocation2 + $0x48] sm:$0xff]
    %v84 = vld [vmem:[#allocation2 + $0x50] sm:$0xff]
    %v85 = vld [vmem:[#allocation2 + $0x58] sm:$0xff]
    %v86 = vld [vmem:[#allocation2 + $0x60] sm:$0xff]
    %v87 = vld [vmem:[#allocation2 + $0x68] sm:$0xff]
    %v88 = vld [vmem:[#allocation2 + $0x70] sm:$0xff]
    %v89 = vld [vmem:[#allocation2 + $0x78] sm:$0xff]
    %v90 = vld [vmem:[%s2] sm:$0x3]
    %v92 = vperm.slane %v90, 0
    %v93 = vperm.slane %v90, 1
    %v112 = vunpack.c.l.b16 %v74
    %v113 = vunpack.c.h.b16 %v74
    %v114 = vunpack.c.l.b16 %v75
    %v115 = vunpack.c.h.b16 %v75
    %v116 = vunpack.c.l.b16 %v76
    %v117 = vunpack.c.h.b16 %v76
    %v118 = vunpack.c.l.b16 %v77
    %v119 = vunpack.c.h.b16 %v77
    %v120 = vunpack.c.l.b16 %v78
    %v121 = vunpack.c.h.b16 %v78
    %v122 = vunpack.c.l.b16 %v79
    %v123 = vunpack.c.h.b16 %v79
    %v124 = vunpack.c.l.b16 %v80
    %v125 = vunpack.c.h.b16 %v80
    %v126 = vunpack.c.l.b16 %v81
    %v127 = vunpack.c.h.b16 %v81
    %v128 = vunpack.c.l.b16 %v82
    %v129 = vunpack.c.h.b16 %v82
    %v130 = vunpack.c.l.b16 %v83
    %v131 = vunpack.c.h.b16 %v83
    %v132 = vunpack.c.l.b16 %v84
    %v133 = vunpack.c.h.b16 %v84
    %v134 = vunpack.c.l.b16 %v85
    %v135 = vunpack.c.h.b16 %v85
    %v136 = vunpack.c.l.b16 %v86
    %v137 = vunpack.c.h.b16 %v86
    %v138 = vunpack.c.l.b16 %v87
    %v139 = vunpack.c.h.b16 %v87
    %v140 = vunpack.c.l.b16 %v88
    %v141 = vunpack.c.h.b16 %v88
    %v142 = vunpack.c.l.b16 %v89
    %v143 = vunpack.c.h.b16 %v89
    %v144 = vpack.c.b16 %v114, %v112
    %v145 = vpack.c.b16 %v115, %v113
    %v146 = vpack.c.b16 %v118, %v116
    %v147 = vpack.c.b16 %v119, %v117
    %v148 = vpack.c.b16 %v122, %v120
    %v149 = vpack.c.b16 %v123, %v121
    %v150 = vpack.c.b16 %v126, %v124
    %v151 = vpack.c.b16 %v127, %v125
    %v152 = vpack.c.b16 %v130, %v128
    %v153 = vpack.c.b16 %v131, %v129
    %v154 = vpack.c.b16 %v134, %v132
    %v155 = vpack.c.b16 %v135, %v133
    %v156 = vpack.c.b16 %v138, %v136
    %v157 = vpack.c.b16 %v139, %v137
    %v158 = vpack.c.b16 %v142, %v140
    %v159 = vpack.c.b16 %v143, %v141
    %176 = vmatpush.bf16.msra.mxu0 %v158
    %177 = vmatpush.bf16.msra.mxu0 %v156
    %178 = vmatpush.bf16.msra.mxu0 %v154
    %179 = vmatpush.bf16.msra.mxu0 %v152
    %180 = vmatpush.bf16.msra.mxu0 %v150
    %181 = vmatpush.bf16.msra.mxu0 %v148
    %182 = vmatpush.bf16.msra.mxu0 %v146
    %183 = vmatpush.bf16.msra.mxu0 %v144
    %184 = vmatmul.bf16.gmra.mxu0 %v73
    %v185 = vpop.f32.mrf.mxu0
    %v186 = vadd.f32 %v92, %v185
    %v187 = vpop.f32.mrf.mxu0
    %188 = vdwg.mxu0
    %189 = vmatpush.bf16.msra.mxu0 %v159
    %190 = vmatpush.bf16.msra.mxu0 %v157
    %191 = vmatpush.bf16.msra.mxu0 %v155
    %192 = vmatpush.bf16.msra.mxu0 %v153
    %193 = vmatpush.bf16.msra.mxu0 %v151
    %194 = vmatpush.bf16.msra.mxu0 %v149
    %195 = vmatpush.bf16.msra.mxu0 %v147
    %196 = vmatpush.bf16.msra.mxu0 %v145
    %197 = vmatmul.bf16.gmra.mxu0 %v73
    %v198 = vpop.f32.mrf.mxu0
    %v199 = vadd.f32 %v93, %v198
    %v200 = vpop.f32.mrf.mxu0
    %201 = vdwg.mxu0
    %v202 = vmax.f32 %v186, 0.0
    %v203 = vmax.f32 %v199, 0.0
    %v204 = vpack.c.bf16 %v202, %v202
    %v205 = vpack.c.bf16 %v203, %v203
    %v206 = vld [vmem:[#allocation4] sm:$0xff]
    %v207 = vld [vmem:[#allocation4 + $0x8] sm:$0xff]
    %v208 = vld [vmem:[#allocation4 + $0x10] sm:$0xff]
    %v209 = vld [vmem:[#allocation4 + $0x18] sm:$0xff]
    %v210 = vld [vmem:[#allocation4 + $0x20] sm:$0xff]
    %v211 = vld [vmem:[#allocation4 + $0x28] sm:$0xff]
    %v212 = vld [vmem:[#allocation4 + $0x30] sm:$0xff]
    %v213 = vld [vmem:[#allocation4 + $0x38] sm:$0xff]
    %v214 = vld [vmem:[#allocation4 + $0x40] sm:$0xff]
    %v215 = vld [vmem:[#allocation4 + $0x48] sm:$0xff]
    %v216 = vld [vmem:[#allocation4 + $0x50] sm:$0xff]
    %v217 = vld [vmem:[#allocation4 + $0x58] sm:$0xff]
    %v218 = vld [vmem:[#allocation4 + $0x60] sm:$0xff]
    %v219 = vld [vmem:[#allocation4 + $0x68] sm:$0xff]
    %v220 = vld [vmem:[#allocation4 + $0x70] sm:$0xff]
    %v221 = vld [vmem:[#allocation4 + $0x78] sm:$0xff]
    %v222 = vld [vmem:[#allocation4 + $0x80] sm:$0xff]
    %v223 = vld [vmem:[#allocation4 + $0x88] sm:$0xff]
    %v224 = vld [vmem:[#allocation4 + $0x90] sm:$0xff]
    %v225 = vld [vmem:[#allocation4 + $0x98] sm:$0xff]
    %v226 = vld [vmem:[#allocation4 + $0xa0] sm:$0xff]
    %v227 = vld [vmem:[#allocation4 + $0xa8] sm:$0xff]
    %v228 = vld [vmem:[#allocation4 + $0xb0] sm:$0xff]
    %v229 = vld [vmem:[#allocation4 + $0xb8] sm:$0xff]
    %v230 = vld [vmem:[#allocation4 + $0xc0] sm:$0xff]
    %v231 = vld [vmem:[#allocation4 + $0xc8] sm:$0xff]
    %v232 = vld [vmem:[#allocation4 + $0xd0] sm:$0xff]
    %v233 = vld [vmem:[#allocation4 + $0xd8] sm:$0xff]
    %v234 = vld [vmem:[#allocation4 + $0xe0] sm:$0xff]
    %v235 = vld [vmem:[#allocation4 + $0xe8] sm:$0xff]
    %v236 = vld [vmem:[#allocation4 + $0xf0] sm:$0xff]
    %v237 = vld [vmem:[#allocation4 + $0xf8] sm:$0xff]
    %v238 = vld [vmem:[%s4] sm:$0x3]
    %v240 = vperm.slane %v238, 0
    %v241 = vperm.slane %v238, 1
    %v276 = vunpack.c.l.b16 %v206
    %v277 = vunpack.c.h.b16 %v206
    %v278 = vunpack.c.l.b16 %v207
    %v279 = vunpack.c.h.b16 %v207
    %v280 = vunpack.c.l.b16 %v208
    %v281 = vunpack.c.h.b16 %v208
    %v282 = vunpack.c.l.b16 %v209
    %v283 = vunpack.c.h.b16 %v209
    %v284 = vunpack.c.l.b16 %v210
    %v285 = vunpack.c.h.b16 %v210
    %v286 = vunpack.c.l.b16 %v211
    %v287 = vunpack.c.h.b16 %v211
    %v288 = vunpack.c.l.b16 %v212
    %v289 = vunpack.c.h.b16 %v212
    %v290 = vunpack.c.l.b16 %v213
    %v291 = vunpack.c.h.b16 %v213
    %v292 = vunpack.c.l.b16 %v214
    %v293 = vunpack.c.h.b16 %v214
    %v294 = vunpack.c.l.b16 %v215
    %v295 = vunpack.c.h.b16 %v215
    %v296 = vunpack.c.l.b16 %v216
    %v297 = vunpack.c.h.b16 %v216
    %v298 = vunpack.c.l.b16 %v217
    %v299 = vunpack.c.h.b16 %v217
    %v300 = vunpack.c.l.b16 %v218
    %v301 = vunpack.c.h.b16 %v218
    %v302 = vunpack.c.l.b16 %v219
    %v303 = vunpack.c.h.b16 %v219
    %v304 = vunpack.c.l.b16 %v220
    %v305 = vunpack.c.h.b16 %v220
    %v306 = vunpack.c.l.b16 %v221
    %v307 = vunpack.c.h.b16 %v221
    %v308 = vunpack.c.l.b16 %v222
    %v309 = vunpack.c.h.b16 %v222
    %v310 = vunpack.c.l.b16 %v223
    %v311 = vunpack.c.h.b16 %v223
    %v312 = vunpack.c.l.b16 %v224
    %v313 = vunpack.c.h.b16 %v224
    %v314 = vunpack.c.l.b16 %v225
    %v315 = vunpack.c.h.b16 %v225
    %v316 = vunpack.c.l.b16 %v226
    %v317 = vunpack.c.h.b16 %v226
    %v318 = vunpack.c.l.b16 %v227
    %v319 = vunpack.c.h.b16 %v227
    %v320 = vunpack.c.l.b16 %v228
    %v321 = vunpack.c.h.b16 %v228
    %v322 = vunpack.c.l.b16 %v229
    %v323 = vunpack.c.h.b16 %v229
    %v324 = vunpack.c.l.b16 %v230
    %v325 = vunpack.c.h.b16 %v230
    %v326 = vunpack.c.l.b16 %v231
    %v327 = vunpack.c.h.b16 %v231
    %v328 = vunpack.c.l.b16 %v232
    %v329 = vunpack.c.h.b16 %v232
    %v330 = vunpack.c.l.b16 %v233
    %v331 = vunpack.c.h.b16 %v233
    %v332 = vunpack.c.l.b16 %v234
    %v333 = vunpack.c.h.b16 %v234
    %v334 = vunpack.c.l.b16 %v235
    %v335 = vunpack.c.h.b16 %v235
    %v336 = vunpack.c.l.b16 %v236
    %v337 = vunpack.c.h.b16 %v236
    %v338 = vunpack.c.l.b16 %v237
    %v339 = vunpack.c.h.b16 %v237
    %v340 = vpack.c.b16 %v278, %v276
    %v341 = vpack.c.b16 %v279, %v277
    %v342 = vpack.c.b16 %v282, %v280
    %v343 = vpack.c.b16 %v283, %v281
    %v344 = vpack.c.b16 %v286, %v284
    %v345 = vpack.c.b16 %v287, %v285
    %v346 = vpack.c.b16 %v290, %v288
    %v347 = vpack.c.b16 %v291, %v289
    %v348 = vpack.c.b16 %v294, %v292
    %v349 = vpack.c.b16 %v295, %v293
    %v350 = vpack.c.b16 %v298, %v296
    %v351 = vpack.c.b16 %v299, %v297
    %v352 = vpack.c.b16 %v302, %v300
    %v353 = vpack.c.b16 %v303, %v301
    %v354 = vpack.c.b16 %v306, %v304
    %v355 = vpack.c.b16 %v307, %v305
    %v356 = vpack.c.b16 %v310, %v308
    %v357 = vpack.c.b16 %v311, %v309
    %v358 = vpack.c.b16 %v314, %v312
    %v359 = vpack.c.b16 %v315, %v313
    %v360 = vpack.c.b16 %v318, %v316
    %v361 = vpack.c.b16 %v319, %v317
    %v362 = vpack.c.b16 %v322, %v320
    %v363 = vpack.c.b16 %v323, %v321
    %v364 = vpack.c.b16 %v326, %v324
    %v365 = vpack.c.b16 %v327, %v325
    %v366 = vpack.c.b16 %v330, %v328
    %v367 = vpack.c.b16 %v331, %v329
    %v368 = vpack.c.b16 %v334, %v332
    %v369 = vpack.c.b16 %v335, %v333
    %v370 = vpack.c.b16 %v338, %v336
    %v371 = vpack.c.b16 %v339, %v337
    %404 = vmatpush.bf16.msra.mxu0 %v354
    %405 = vmatpush.bf16.msra.mxu0 %v352
    %406 = vmatpush.bf16.msra.mxu0 %v350
    %407 = vmatpush.bf16.msra.mxu0 %v348
    %408 = vmatpush.bf16.msra.mxu0 %v346
    %409 = vmatpush.bf16.msra.mxu0 %v344
    %410 = vmatpush.bf16.msra.mxu0 %v342
    %411 = vmatpush.bf16.msra.mxu0 %v340
    %412 = vmatmul.bf16.gmra.mxu0 %v204
    %v413 = vpop.f32.mrf.mxu0
    %v414 = vadd.f32 %v240, %v413
    %v415 = vpop.f32.mrf.mxu0
    %416 = vdwg.mxu0
    %417 = vmatpush.bf16.msra.mxu0 %v370
    %418 = vmatpush.bf16.msra.mxu0 %v368
    %419 = vmatpush.bf16.msra.mxu0 %v366
    %420 = vmatpush.bf16.msra.mxu0 %v364
    %421 = vmatpush.bf16.msra.mxu0 %v362
    %422 = vmatpush.bf16.msra.mxu0 %v360
    %423 = vmatpush.bf16.msra.mxu0 %v358
    %424 = vmatpush.bf16.msra.mxu0 %v356
    %425 = vmatmul.bf16.gmra.mxu0 %v205
    %v426 = vpop.f32.mrf.mxu0
    %v427 = vadd.f32 %v414, %v426
    %v428 = vpop.f32.mrf.mxu0
    %429 = vdwg.mxu0
    %430 = vmatpush.bf16.msra.mxu0 %v355
    %431 = vmatpush.bf16.msra.mxu0 %v353
    %432 = vmatpush.bf16.msra.mxu0 %v351
    %433 = vmatpush.bf16.msra.mxu0 %v349
    %434 = vmatpush.bf16.msra.mxu0 %v347
    %435 = vmatpush.bf16.msra.mxu0 %v345
    %436 = vmatpush.bf16.msra.mxu0 %v343
    %437 = vmatpush.bf16.msra.mxu0 %v341
    %438 = vmatmul.bf16.gmra.mxu0 %v204
    %v439 = vpop.f32.mrf.mxu0
    %v440 = vadd.f32 %v241, %v439
    %v441 = vpop.f32.mrf.mxu0
    %442 = vdwg.mxu0
    %443 = vmatpush.bf16.msra.mxu0 %v371
    %444 = vmatpush.bf16.msra.mxu0 %v369
    %445 = vmatpush.bf16.msra.mxu0 %v367
    %446 = vmatpush.bf16.msra.mxu0 %v365
    %447 = vmatpush.bf16.msra.mxu0 %v363
    %448 = vmatpush.bf16.msra.mxu0 %v361
    %449 = vmatpush.bf16.msra.mxu0 %v359
    %450 = vmatpush.bf16.msra.mxu0 %v357
    %451 = vmatmul.bf16.gmra.mxu0 %v205
    %v452 = vpop.f32.mrf.mxu0
    %v453 = vadd.f32 %v440, %v452
    %v454 = vpop.f32.mrf.mxu0
    %455 = vdwg.mxu0
    %v456 = vmax.f32 %v427, 0.0
    %v457 = vmax.f32 %v453, 0.0
    %v458 = vpack.c.bf16 %v456, %v456
    %v459 = vpack.c.bf16 %v457, %v457
    %v460 = vld [vmem:[#allocation6] sm:$0xf]
    %v461 = vld [vmem:[#allocation6 + $0x4] sm:$0xf]
    %v462 = vld [vmem:[#allocation6 + $0x8] sm:$0xf]
    %v463 = vld [vmem:[#allocation6 + $0xc] sm:$0xf]
    %v464 = vld [vmem:[#allocation6 + $0x10] sm:$0xf]
    %v465 = vld [vmem:[#allocation6 + $0x14] sm:$0xf]
    %v466 = vld [vmem:[#allocation6 + $0x18] sm:$0xf]
    %v467 = vld [vmem:[#allocation6 + $0x1c] sm:$0xf]
    %v468 = vld [vmem:[#allocation6 + $0x20] sm:$0xf]
    %v469 = vld [vmem:[#allocation6 + $0x24] sm:$0xf]
    %v470 = vld [vmem:[#allocation6 + $0x28] sm:$0xf]
    %v471 = vld [vmem:[#allocation6 + $0x2c] sm:$0xf]
    %v472 = vld [vmem:[#allocation6 + $0x30] sm:$0xf]
    %v473 = vld [vmem:[#allocation6 + $0x34] sm:$0xf]
    %v474 = vld [vmem:[#allocation6 + $0x38] sm:$0xf]
    %v475 = vld [vmem:[#allocation6 + $0x3c] sm:$0xf]
    %v476 = vld [vmem:[#allocation6 + $0x40] sm:$0xf]
    %v477 = vld [vmem:[#allocation6 + $0x44] sm:$0xf]
    %v478 = vld [vmem:[#allocation6 + $0x48] sm:$0xf]
    %v479 = vld [vmem:[#allocation6 + $0x4c] sm:$0xf]
    %v480 = vld [vmem:[#allocation6 + $0x50] sm:$0xf]
    %v481 = vld [vmem:[#allocation6 + $0x54] sm:$0xf]
    %v482 = vld [vmem:[#allocation6 + $0x58] sm:$0xf]
    %v483 = vld [vmem:[#allocation6 + $0x5c] sm:$0xf]
    %v484 = vld [vmem:[#allocation6 + $0x60] sm:$0xf]
    %v485 = vld [vmem:[#allocation6 + $0x64] sm:$0xf]
    %v486 = vld [vmem:[#allocation6 + $0x68] sm:$0xf]
    %v487 = vld [vmem:[#allocation6 + $0x6c] sm:$0xf]
    %v488 = vld [vmem:[#allocation6 + $0x70] sm:$0xf]
    %v489 = vld [vmem:[#allocation6 + $0x74] sm:$0xf]
    %v490 = vld [vmem:[#allocation6 + $0x78] sm:$0xf]
    %v491 = vld [vmem:[#allocation6 + $0x7c] sm:$0xf]
    %v492 = vld [vmem:[%s6] sm:$0x1]
    %v494 = vperm.slane %v492, 0
    %v528 = vunpack.c.l.b16 %v460
    %v529 = vunpack.c.l.b16 %v461
    %v530 = vunpack.c.l.b16 %v462
    %v531 = vunpack.c.l.b16 %v463
    %v532 = vunpack.c.l.b16 %v464
    %v533 = vunpack.c.l.b16 %v465
    %v534 = vunpack.c.l.b16 %v466
    %v535 = vunpack.c.l.b16 %v467
    %v536 = vunpack.c.l.b16 %v468
    %v537 = vunpack.c.l.b16 %v469
    %v538 = vunpack.c.l.b16 %v470
    %v539 = vunpack.c.l.b16 %v471
    %v540 = vunpack.c.l.b16 %v472
    %v541 = vunpack.c.l.b16 %v473
    %v542 = vunpack.c.l.b16 %v474
    %v543 = vunpack.c.l.b16 %v475
    %v544 = vunpack.c.l.b16 %v476
    %v545 = vunpack.c.l.b16 %v477
    %v546 = vunpack.c.l.b16 %v478
    %v547 = vunpack.c.l.b16 %v479
    %v548 = vunpack.c.l.b16 %v480
    %v549 = vunpack.c.l.b16 %v481
    %v550 = vunpack.c.l.b16 %v482
    %v551 = vunpack.c.l.b16 %v483
    %v552 = vunpack.c.l.b16 %v484
    %v553 = vunpack.c.l.b16 %v485
    %v554 = vunpack.c.l.b16 %v486
    %v555 = vunpack.c.l.b16 %v487
    %v556 = vunpack.c.l.b16 %v488
    %v557 = vunpack.c.l.b16 %v489
    %v558 = vunpack.c.l.b16 %v490
    %v559 = vunpack.c.l.b16 %v491
    %v560 = vpack.c.b16 %v529, %v528
    %v561 = vpack.c.b16 %v531, %v530
    %v562 = vpack.c.b16 %v533, %v532
    %v563 = vpack.c.b16 %v535, %v534
    %v564 = vpack.c.b16 %v537, %v536
    %v565 = vpack.c.b16 %v539, %v538
    %v566 = vpack.c.b16 %v541, %v540
    %v567 = vpack.c.b16 %v543, %v542
    %v568 = vpack.c.b16 %v545, %v544
    %v569 = vpack.c.b16 %v547, %v546
    %v570 = vpack.c.b16 %v549, %v548
    %v571 = vpack.c.b16 %v551, %v550
    %v572 = vpack.c.b16 %v553, %v552
    %v573 = vpack.c.b16 %v555, %v554
    %v574 = vpack.c.b16 %v557, %v556
    %v575 = vpack.c.b16 %v559, %v558
    %592 = vmatpush.bf16.msra.mxu0 %v567
    %593 = vmatpush.bf16.msra.mxu0 %v566
    %594 = vmatpush.bf16.msra.mxu0 %v565
    %595 = vmatpush.bf16.msra.mxu0 %v564
    %596 = vmatpush.bf16.msra.mxu0 %v563
    %597 = vmatpush.bf16.msra.mxu0 %v562
    %598 = vmatpush.bf16.msra.mxu0 %v561
    %599 = vmatpush.bf16.msra.mxu0 %v560
    %600 = vmatmul.bf16.gmra.mxu0 %v458
    %v601 = vpop.f32.mrf.mxu0
    %v602 = vadd.f32 %v494, %v601
    %v603 = vpop.f32.mrf.mxu0
    %604 = vdwg.mxu0
    %605 = vmatpush.bf16.msra.mxu0 %v575
    %606 = vmatpush.bf16.msra.mxu0 %v574
    %607 = vmatpush.bf16.msra.mxu0 %v573
    %608 = vmatpush.bf16.msra.mxu0 %v572
    %609 = vmatpush.bf16.msra.mxu0 %v571
    %610 = vmatpush.bf16.msra.mxu0 %v570
    %611 = vmatpush.bf16.msra.mxu0 %v569
    %612 = vmatpush.bf16.msra.mxu0 %v568
    %613 = vmatmul.bf16.gmra.mxu0 %v459
    %v614 = vpop.f32.mrf.mxu0
    %v615 = vadd.f32 %v602, %v614
    %v616 = vpop.f32.mrf.mxu0
    %617 = vdwg.mxu0
    %618 = vst [vmem:[%s7] sm:$0xff] %v615
    // Predicated region
    $region42: #{continuous_q_forward.1} parent=1 // pred_check
      _
    $region43: #{continuous_q_forward.1} parent=1 // pred_check_branch
      %620 = sbr.rel (0) target = $region45
    $region44: #{continuous_q_forward.1} parent=1 // pred_region
      _
    $region45: #{continuous_q_forward.1} parent=1 // pred_fallthru
      _
    // Predicated region
    $region46: #{continuous_q_forward.1} parent=1 // pred_check
      _
    $region47: #{continuous_q_forward.1} parent=1 // pred_check_branch
      %622 = sbr.rel (0) target = $region49
    $region48: #{continuous_q_forward.1} parent=1 // pred_region
      _
    $region49: #{continuous_q_forward.1} parent=1 // pred_fallthru
      _
    %623 = vsyncpa [#allocation3], 1
    %624 = vsyncpa [#allocation5], 1

</llo_original>
